<compile_context>
chip_gen: v7x
topology: tpu7x:2x2x1
jax: 0.10.0
libtpu: 0.0.40
codegen_flags: <defaults>
</compile_context>

<pallas_src>
import math

import jax
import jax.numpy as jnp
from jax.experimental import pallas as pl
from jax.experimental.pallas import tpu as pltpu

LANE = 128     # vreg lane width
SUBLANE = 8    # f32 sublane count


def _round_up(n, m):
    return ((n + m - 1) // m) * m


def _pad_axis(x, axis, target):
    pad = target - x.shape[axis]
    if pad <= 0:
        return x
    widths = [(0, 0)] * x.ndim
    widths[axis] = (0, pad)
    return jnp.pad(x, widths)  # zero padding


def _choose_batch_tiling(B, batch_tile, n_cores=2):
    """Pick (tile, padded_batch) so that: tile is a sublane multiple, the grid has an
    even number of steps (>=2) when there is enough work (v7x megacore sharding; no-op
    on single-TC v5e/v6e), and the batch padding is minimal (zero in steady state)."""
    batch_tile = max(SUBLANE, _round_up(batch_tile, SUBLANE))
    b8 = _round_up(B, SUBLANE)
    n_steps = -(-b8 // batch_tile)                       # ceil-div
    if b8 >= n_cores * SUBLANE:
        n_steps = max(_round_up(n_steps, n_cores), n_cores)
    tb = _round_up(-(-b8 // n_steps), SUBLANE)           # <= batch_tile
    b_pad = tb * n_steps
    return tb, b_pad


def make_actor_kernel(action_lim: float):
    def actor_kernel(x_ref, w1_ref, b1_ref, w2_ref, b2_ref,
                     w3_ref, b3_ref, w4_ref, b4_ref, out_ref):
        wdt = w1_ref.dtype  # bf16 (MXU-friendly) or f32
        x = x_ref[...].astype(wdt)     # no-op when x was staged in the weight dtype
        # fc1 + relu
        # TODO(synk): K=state_dim (4) underfills the MXU K dim; could be a few VPU
        # broadcast-MACs instead -- only worth it if a bundle dump shows the MXU push
        # slot binding at large tb (it is <1% of FLOPs).
        h = jnp.dot(x, w1_ref[...], preferred_element_type=jnp.float32) + b1_ref[...]
        h = jnp.maximum(h, 0.0)
        # fc2 + relu
        h = jnp.dot(h.astype(wdt), w2_ref[...], preferred_element_type=jnp.float32) + b2_ref[...]
        h = jnp.maximum(h, 0.0)
        # fc3 + relu (output lane-padded 64 -> 128; the pad lanes stay exactly 0)
        h = jnp.dot(h.astype(wdt), w3_ref[...], preferred_element_type=jnp.float32) + b3_ref[...]
        h = jnp.maximum(h, 0.0)
        # fc4 + tanh * action_lim: real N = action_dim (no lane padding on the output),
        # so the store is only the real action columns and tanh isn't over-computed.
        a = jnp.dot(h.astype(wdt), w4_ref[...], preferred_element_type=jnp.float32) + b4_ref[...]
        out_ref[...] = jnp.tanh(a) * jnp.float32(action_lim)
    return actor_kernel


def actor_forward(state, params, action_lim, *, use_bf16=True, batch_tile=2048):
    """state: [B, state_dim] float32. params: dict of (w [in,out] f32, b [1,out] f32)."""
    w1, b1 = params["fc1"]
    w2, b2 = params["fc2"]
    w3, b3 = params["fc3"]
    w4, b4 = params["fc4"]

    B, state_dim = state.shape
    action_dim = w4.shape[1]
    d1, d2 = w1.shape[1], w2.shape[1]          # 256, 128 (already lane multiples)

    # fc3 output lane-padded 64 -> 128 (zeros => identity: relu(0)=0 and the padded
    # w4 K-rows are zero).  fc4 output stays at the real action_dim.
    h3_pad = _round_up(w3.shape[1], LANE)      # 64 -> 128
    w3p = _pad_axis(w3, 1, h3_pad)
    b3p = _pad_axis(b3, 1, h3_pad)
    w4p = _pad_axis(w4, 0, h3_pad)             # K only; N = action_dim unpadded

    # Batch tiling: even grid-step count for v7x megacore, minimal (usually zero) pad.
    tb, b_pad = _choose_batch_tiling(B, batch_tile)

    # MXU operands in bf16 (f32 accumulation); biases / elementwise math stay f32.
    wdt = jnp.bfloat16 if use_bf16 else jnp.float32
    # Stage the state in the weight dtype (halves its DMA for bf16, drops per-tile cast).
    # _pad_axis is a no-op when b_pad == B (steady state).
    # TODO(synk): state block is 128-lane padded in VMEM (~32x waste at state_dim=4);
    # could pre-pack to (b_pad/32, 128) in HBM and unpack with one XLU pass if VMEM
    # headroom is ever needed for a larger tb.
    xp = _pad_axis(state.astype(wdt), 0, b_pad)
    w1c, w2c, w3c, w4c = (w.astype(wdt) for w in (w1, w2, w3p, w4p))

    grid = (b_pad // tb,)
    const = lambda i: (0, 0)   # weights/biases: one resident block for all grid steps
    # TODO(synk): if VMEM gets tight at larger tb, mark the constant-index weight specs
    # pipeline_mode=pl.Buffered(1) -- their second pipeline buffer is dead weight.
    in_specs = [
        pl.BlockSpec((tb, state_dim), lambda i: (i, 0)),
        pl.BlockSpec((state_dim, d1), const),      pl.BlockSpec((1, d1), const),
        pl.BlockSpec((d1, d2), const),             pl.BlockSpec((1, d2), const),
        pl.BlockSpec((d2, h3_pad), const),         pl.BlockSpec((1, h3_pad), const),
        pl.BlockSpec((h3_pad, action_dim), const), pl.BlockSpec((1, action_dim), const),
    ]
    out_specs = pl.BlockSpec((tb, action_dim), lambda i: (i, 0))

    flops = 2 * b_pad * (state_dim * d1 + d1 * d2 + d2 * h3_pad + h3_pad * action_dim)
    bytes_w = sum(int(a.size) * a.dtype.itemsize
                  for a in (w1c, b1, w2c, b2, w3c, b3p, w4c, b4))
    cost = pl.CostEstimate(
        flops=flops,
        transcendentals=b_pad * action_dim,
        bytes_accessed=int(xp.size) * xp.dtype.itemsize
        + b_pad * action_dim * 4 + bytes_w,
    )

    out = pl.pallas_call(
        make_actor_kernel(float(action_lim)),
        out_shape=jax.ShapeDtypeStruct((b_pad, action_dim), jnp.float32),
        grid=grid,
        in_specs=in_specs,
        out_specs=out_specs,
        compiler_params=pltpu.CompilerParams(
            dimension_semantics=("parallel",),
            # Explicit budget: comfortable for tb=2048 on v5e's 16 MiB scoped default
            # and well inside v7x's 64 MiB physical VMEM.
            vmem_limit_bytes=32 * 1024 * 1024,
        ),
        cost_estimate=cost,
    )(xp, w1c, b1, w2c, b2, w3c, b3p, w4c, b4)

    # Note: padded tail rows (when b_pad > B) contain garbage actions and are sliced
    # off here; only this (b_pad, action_dim) narrow array is touched -- cheap.
    return out if b_pad == B else out[:B]


def fanin_init_jax(key, shape_out_in):
    """Mimics fanin_init: uniform(-v, v), v = 1/sqrt(size[0]) on the PyTorch
    [out, in] weight shape. Returns the transposed [in, out] weight for the kernel."""
    out_f, in_f = shape_out_in
    v = 1.0 / math.sqrt(out_f)  # fanin defaults to size[0] in the reference code
    w = jax.random.uniform(key, (out_f, in_f), jnp.float32, minval=-v, maxval=v)
    return jnp.transpose(w)  # [in, out]


def default_bias_init(key, in_f, out_f):
    """PyTorch nn.Linear default bias init: uniform(-1/sqrt(in_f), 1/sqrt(in_f))."""
    bound = 1.0 / math.sqrt(in_f)
    return jax.random.uniform(key, (1, out_f), jnp.float32, minval=-bound, maxval=bound)


def init_actor_params(key, state_dim, action_dim):
    sizes = [(256, state_dim), (128, 256), (64, 128), (action_dim, 64)]
    names = ["fc1", "fc2", "fc3", "fc4"]
    params = {}
    keys = jax.random.split(key, 2 * len(sizes))
    for i, (name, (out_f, in_f)) in enumerate(zip(names, sizes)):
        w = fanin_init_jax(keys[2 * i], (out_f, in_f))          # [in, out]
        b = default_bias_init(keys[2 * i + 1], in_f, out_f)     # [1, out]
        params[name] = (w, b)
    return params


def actor_forward_ref(state, params, action_lim, *, use_bf16=False):
    """Pure-JAX reference. use_bf16 mirrors the kernel's MXU-operand cast."""
    dt = jnp.bfloat16 if use_bf16 else jnp.float32
    h = state.astype(jnp.float32)
    for name in ("fc1", "fc2", "fc3"):
        w, b = params[name]
        h = jnp.maximum(
            jnp.dot(h.astype(dt), w.astype(dt), preferred_element_type=jnp.float32) + b,
            0.0)
    w, b = params["fc4"]
    a = jnp.dot(h.astype(dt), w.astype(dt), preferred_element_type=jnp.float32) + b
    return jnp.tanh(a) * action_lim


if __name__ == "__main__":
    batch = 2
    state_dim = 4
    action_dim = 2
    action_lim = 2.0

    key = jax.random.PRNGKey(0)
    pkey, xkey, x2key = jax.random.split(key, 3)
    params = init_actor_params(pkey, state_dim, action_dim)
    state = jax.random.normal(xkey, (batch, state_dim), jnp.float32)

    # 1) f32 path: exact semantics of the PyTorch module.
    out_f32 = jax.block_until_ready(
        actor_forward(state, params, action_lim, use_bf16=False))
    ref_f32 = actor_forward_ref(state, params, action_lim, use_bf16=False)
    assert out_f32.shape == (batch, action_dim)
    assert jnp.allclose(out_f32, ref_f32, atol=1e-5, rtol=1e-5), (out_f32, ref_f32)

    # 2) bf16-MXU path (default): tight vs bf16 reference, loose vs f32 reference.
    out_bf16 = jax.block_until_ready(actor_forward(state, params, action_lim))
    ref_bf16 = actor_forward_ref(state, params, action_lim, use_bf16=True)
    assert out_bf16.shape == (batch, action_dim)
    assert jnp.allclose(out_bf16, ref_bf16, atol=2e-3, rtol=2e-3), (out_bf16, ref_bf16)
    assert jnp.allclose(out_bf16, ref_f32, atol=5e-2, rtol=5e-2), (out_bf16, ref_f32)

    # 3) Larger batch exercising the tiled grid (tb=80, grid=4, small batch-tail pad).
    big_state = jax.random.normal(x2key, (300, state_dim), jnp.float32)
    out_big = jax.block_until_ready(
        actor_forward(big_state, params, action_lim, use_bf16=False, batch_tile=128))
    ref_big = actor_forward_ref(big_state, params, action_lim, use_bf16=False)
    assert out_big.shape == (300, action_dim)
    assert jnp.allclose(out_big, ref_big, atol=1e-5, rtol=1e-5)

    print("KERNEL_OK")
</pallas_src>

<mosaic_0001>
module attributes {stable_mosaic.version = 11 : i64} {
  func.func @actor_kernel(%arg0: i32, %arg1: memref<8x4xf32, #tpu.memory_space<vmem>>, %arg2: memref<4x256xf32, #tpu.memory_space<vmem>>, %arg3: memref<1x256xf32, #tpu.memory_space<vmem>>, %arg4: memref<256x128xf32, #tpu.memory_space<vmem>>, %arg5: memref<1x128xf32, #tpu.memory_space<vmem>>, %arg6: memref<128x128xf32, #tpu.memory_space<vmem>>, %arg7: memref<1x128xf32, #tpu.memory_space<vmem>>, %arg8: memref<128x2xf32, #tpu.memory_space<vmem>>, %arg9: memref<1x2xf32, #tpu.memory_space<vmem>>, %arg10: memref<8x2xf32, #tpu.memory_space<vmem>>) attributes {dimension_semantics = [#tpu.dimension_semantics<parallel>], iteration_bounds = array<i64: 1>, scalar_prefetch = 0 : i64, scratch_operands = 0 : i64, tpu.core_type = #tpu.core_type<tc>, window_params = [{transform_indices = @transform_0, window_bounds = array<i64: 8, 4>}, {pipeline_mode = #tpu.pipeline_mode<synchronous>, transform_indices = @transform_1, window_bounds = array<i64: 4, 256>}, {pipeline_mode = #tpu.pipeline_mode<synchronous>, transform_indices = @transform_2, window_bounds = array<i64: 1, 256>}, {pipeline_mode = #tpu.pipeline_mode<synchronous>, transform_indices = @transform_3, window_bounds = array<i64: 256, 128>}, {pipeline_mode = #tpu.pipeline_mode<synchronous>, transform_indices = @transform_4, window_bounds = array<i64: 1, 128>}, {pipeline_mode = #tpu.pipeline_mode<synchronous>, transform_indices = @transform_5, window_bounds = array<i64: 128, 128>}, {pipeline_mode = #tpu.pipeline_mode<synchronous>, transform_indices = @transform_6, window_bounds = array<i64: 1, 128>}, {pipeline_mode = #tpu.pipeline_mode<synchronous>, transform_indices = @transform_7, window_bounds = array<i64: 128, 2>}, {pipeline_mode = #tpu.pipeline_mode<synchronous>, transform_indices = @transform_8, window_bounds = array<i64: 1, 2>}, {transform_indices = @transform_9, window_bounds = array<i64: 8, 2>}]} {
    %c0 = arith.constant 0 : index
    %c0_0 = arith.constant 0 : index
    %0 = vector.load %arg1[%c0, %c0_0] : memref<8x4xf32, #tpu.memory_space<vmem>>, vector<8x4xf32>
    %c0_1 = arith.constant 0 : index
    %c0_2 = arith.constant 0 : index
    %1 = vector.load %arg2[%c0_1, %c0_2] : memref<4x256xf32, #tpu.memory_space<vmem>>, vector<4x256xf32>
    %cst = arith.constant dense<0.000000e+00> : vector<8x256xf32>
    %2 = tpu.matmul %0, %1, %cst {dimension_numbers = #tpu.dot_dimension_numbers<[1], [0], [0], [1], [0, 0, 1, 1], [], []>} : vector<8x4xf32>, vector<4x256xf32>, vector<8x256xf32> -> vector<8x256xf32>
    %c0_3 = arith.constant 0 : index
    %c0_4 = arith.constant 0 : index
    %3 = vector.load %arg3[%c0_3, %c0_4] : memref<1x256xf32, #tpu.memory_space<vmem>>, vector<1x256xf32>
    %4 = vector.broadcast %3 : vector<1x256xf32> to vector<8x256xf32>
    %5 = arith.addf %2, %4 : vector<8x256xf32>
    %cst_5 = arith.constant 0.000000e+00 : f32
    %6 = vector.broadcast %cst_5 : f32 to vector<8x256xf32>
    %7 = arith.maximumf %5, %6 : vector<8x256xf32>
    %c0_6 = arith.constant 0 : index
    %c0_7 = arith.constant 0 : index
    %8 = vector.load %arg4[%c0_6, %c0_7] : memref<256x128xf32, #tpu.memory_space<vmem>>, vector<256x128xf32>
    %cst_8 = arith.constant dense<0.000000e+00> : vector<8x128xf32>
    %9 = tpu.matmul %7, %8, %cst_8 {dimension_numbers = #tpu.dot_dimension_numbers<[1], [0], [0], [1], [0, 0, 1, 1], [], []>} : vector<8x256xf32>, vector<256x128xf32>, vector<8x128xf32> -> vector<8x128xf32>
    %c0_9 = arith.constant 0 : index
    %c0_10 = arith.constant 0 : index
    %10 = vector.load %arg5[%c0_9, %c0_10] : memref<1x128xf32, #tpu.memory_space<vmem>>, vector<1x128xf32>
    %11 = vector.broadcast %10 : vector<1x128xf32> to vector<8x128xf32>
    %12 = arith.addf %9, %11 : vector<8x128xf32>
    %cst_11 = arith.constant 0.000000e+00 : f32
    %13 = vector.broadcast %cst_11 : f32 to vector<8x128xf32>
    %14 = arith.maximumf %12, %13 : vector<8x128xf32>
    %c0_12 = arith.constant 0 : index
    %c0_13 = arith.constant 0 : index
    %15 = vector.load %arg6[%c0_12, %c0_13] : memref<128x128xf32, #tpu.memory_space<vmem>>, vector<128x128xf32>
    %cst_14 = arith.constant dense<0.000000e+00> : vector<8x128xf32>
    %16 = tpu.matmul %14, %15, %cst_14 {dimension_numbers = #tpu.dot_dimension_numbers<[1], [0], [0], [1], [0, 0, 1, 1], [], []>} : vector<8x128xf32>, vector<128x128xf32>, vector<8x128xf32> -> vector<8x128xf32>
    %c0_15 = arith.constant 0 : index
    %c0_16 = arith.constant 0 : index
    %17 = vector.load %arg7[%c0_15, %c0_16] : memref<1x128xf32, #tpu.memory_space<vmem>>, vector<1x128xf32>
    %18 = vector.broadcast %17 : vector<1x128xf32> to vector<8x128xf32>
    %19 = arith.addf %16, %18 : vector<8x128xf32>
    %cst_17 = arith.constant 0.000000e+00 : f32
    %20 = vector.broadcast %cst_17 : f32 to vector<8x128xf32>
    %21 = arith.maximumf %19, %20 : vector<8x128xf32>
    %c0_18 = arith.constant 0 : index
    %c0_19 = arith.constant 0 : index
    %22 = vector.load %arg8[%c0_18, %c0_19] : memref<128x2xf32, #tpu.memory_space<vmem>>, vector<128x2xf32>
    %cst_20 = arith.constant dense<0.000000e+00> : vector<8x2xf32>
    %23 = tpu.matmul %21, %22, %cst_20 {dimension_numbers = #tpu.dot_dimension_numbers<[1], [0], [0], [1], [0, 0, 1, 1], [], []>} : vector<8x128xf32>, vector<128x2xf32>, vector<8x2xf32> -> vector<8x2xf32>
    %c0_21 = arith.constant 0 : index
    %c0_22 = arith.constant 0 : index
    %24 = vector.load %arg9[%c0_21, %c0_22] : memref<1x2xf32, #tpu.memory_space<vmem>>, vector<1x2xf32>
    %25 = vector.broadcast %24 : vector<1x2xf32> to vector<8x2xf32>
    %26 = arith.addf %23, %25 : vector<8x2xf32>
    %27 = math.tanh %26 : vector<8x2xf32>
    %cst_23 = arith.constant 2.000000e+00 : f32
    %28 = vector.broadcast %cst_23 : f32 to vector<8x2xf32>
    %29 = arith.mulf %27, %28 : vector<8x2xf32>
    %c0_24 = arith.constant 0 : index
    %c0_25 = arith.constant 0 : index
    %30 = vector.load %arg10[%c0_24, %c0_25] : memref<8x2xf32, #tpu.memory_space<vmem>>, vector<8x2xf32>
    tpu.vector_store %arg10[%c0_24, %c0_25], %29 {strides = array<i32>} : memref<8x2xf32, #tpu.memory_space<vmem>>, vector<8x2xf32>,
    return
  }
  func.func @transform_0(%arg0: i32) -> (i32, i32) {
    %c0_i32 = arith.constant 0 : i32
    %c0_i32_0 = arith.constant 0 : i32
    return %arg0, %c0_i32 : i32, i32
  }
  func.func @transform_1(%arg0: i32) -> (i32, i32) {
    %c0_i32 = arith.constant 0 : i32
    %c0_i32_0 = arith.constant 0 : i32
    %c0_i32_1 = arith.constant 0 : i32
    return %c0_i32, %c0_i32_0 : i32, i32
  }
  func.func @transform_2(%arg0: i32) -> (i32, i32) {
    %c0_i32 = arith.constant 0 : i32
    %c0_i32_0 = arith.constant 0 : i32
    %c0_i32_1 = arith.constant 0 : i32
    return %c0_i32, %c0_i32_0 : i32, i32
  }
  func.func @transform_3(%arg0: i32) -> (i32, i32) {
    %c0_i32 = arith.constant 0 : i32
    %c0_i32_0 = arith.constant 0 : i32
    %c0_i32_1 = arith.constant 0 : i32
    return %c0_i32, %c0_i32_0 : i32, i32
  }
  func.func @transform_4(%arg0: i32) -> (i32, i32) {
    %c0_i32 = arith.constant 0 : i32
    %c0_i32_0 = arith.constant 0 : i32
    %c0_i32_1 = arith.constant 0 : i32
    return %c0_i32, %c0_i32_0 : i32, i32
  }
  func.func @transform_5(%arg0: i32) -> (i32, i32) {
    %c0_i32 = arith.constant 0 : i32
    %c0_i32_0 = arith.constant 0 : i32
    %c0_i32_1 = arith.constant 0 : i32
    return %c0_i32, %c0_i32_0 : i32, i32
  }
  func.func @transform_6(%arg0: i32) -> (i32, i32) {
    %c0_i32 = arith.constant 0 : i32
    %c0_i32_0 = arith.constant 0 : i32
    %c0_i32_1 = arith.constant 0 : i32
    return %c0_i32, %c0_i32_0 : i32, i32
  }
  func.func @transform_7(%arg0: i32) -> (i32, i32) {
    %c0_i32 = arith.constant 0 : i32
    %c0_i32_0 = arith.constant 0 : i32
    %c0_i32_1 = arith.constant 0 : i32
    return %c0_i32, %c0_i32_0 : i32, i32
  }
  func.func @transform_8(%arg0: i32) -> (i32, i32) {
    %c0_i32 = arith.constant 0 : i32
    %c0_i32_0 = arith.constant 0 : i32
    %c0_i32_1 = arith.constant 0 : i32
    return %c0_i32, %c0_i32_0 : i32, i32
  }
  func.func @transform_9(%arg0: i32) -> (i32, i32) {
    %c0_i32 = arith.constant 0 : i32
    %c0_i32_0 = arith.constant 0 : i32
    return %arg0, %c0_i32 : i32, i32
  }
}

</mosaic_0001>

<llo_original>
// kernel: tpu_custom_call.1
$region0: #{tpu_custom_call.1}
  #allocation0 [shape = 'u32[]', space=smem, size = 0x4, offset = 0x4, fixed_abs, tag = 'smem constant byte address 0x4 - core index']
  #allocation1 [shape = 'u32[144,128]{1,0:T(1,128)}', space=vmem, size = 0x12000, scoped, tag = 'internal scratch']
  %s0 = inlined_call_operand.vmem [shape: f32[8,4], index: 0, kind: input, shape index: {}]
  %s1 = inlined_call_operand.vmem [shape: f32[4,256], index: 1, kind: input, shape index: {}]
  %s2 = inlined_call_operand.vmem [shape: f32[1,256], index: 2, kind: input, shape index: {}]
  %s3 = inlined_call_operand.hbm [shape: f32[256,128], index: 3, kind: input, shape index: {}]
  %s4 = inlined_call_operand.vmem [shape: f32[1,128], index: 4, kind: input, shape index: {}]
  %s5 = inlined_call_operand.vmem [shape: f32[128,128], index: 5, kind: input, shape index: {}]
  %s6 = inlined_call_operand.vmem [shape: f32[1,128], index: 6, kind: input, shape index: {}]
  %s7 = inlined_call_operand.vmem [shape: f32[128,2], index: 7, kind: input, shape index: {}]
  %s8 = inlined_call_operand.vmem [shape: f32[1,2], index: 8, kind: input, shape index: {}]
  %s9 = inlined_call_operand.vmem [shape: f32[8,2], index: 9, kind: output, shape index: {}]
  %s10 = sld [smem:[#allocation0]]
  $region50: #{tpu_custom_call.1} parent=0
    _
  %s12 = ssub.s32 1, %s10
  %s13 = scalar_select 0, %s12, %s10
  $region1: #{tpu_custom_call.1} parent=0
    #allocation2 [shape = 'u8[131072]{0}', space=vmem, size = 0x20000, scoped, tag = 'input window, operand 3, single buffered']
    #allocation3 [shape = 's32[1]{0}', space=sflag, size = 0x4, scoped, tag = 'scoped memory for tpu_custom_call.1']
    %14 = vsyncpa [#allocation3], 0
    // Predicated region
    $region2: #{tpu_custom_call.1} parent=1 // pred_check
      _
    $region3: #{tpu_custom_call.1} parent=1 // pred_check_branch
      %16 = sbr.rel (0) target = $region5
    $region4: #{tpu_custom_call.1} parent=1 // pred_region
      _
    $region5: #{tpu_custom_call.1} parent=1 // pred_fallthru
      _
    // Predicated region
    $region6: #{tpu_custom_call.1} parent=1 // pred_check
      _
    $region7: #{tpu_custom_call.1} parent=1 // pred_check_branch
      %18 = sbr.rel (0) target = $region9
    $region8: #{tpu_custom_call.1} parent=1 // pred_region
      _
    $region9: #{tpu_custom_call.1} parent=1 // pred_fallthru
      _
    // Predicated region
    $region10: #{tpu_custom_call.1} parent=1 // pred_check
      _
    $region11: #{tpu_custom_call.1} parent=1 // pred_check_branch
      %20 = sbr.rel (0) target = $region13
    $region12: #{tpu_custom_call.1} parent=1 // pred_region
      _
    $region13: #{tpu_custom_call.1} parent=1 // pred_fallthru
      _
    // Predicated region
    $region14: #{tpu_custom_call.1} parent=1 // pred_check
      _
    $region15: #{tpu_custom_call.1} parent=1 // pred_check_branch
      %22 = sbr.rel (0) target = $region17
    $region16: #{tpu_custom_call.1} parent=1 // pred_region
      %s24 = ssub.s32 4096, 4096
      %25 = vsyncadd [#allocation3], %s24
      %s26 = sshll.u32 [#allocation2], 4
      %s27 = int_to_ptr.vmem [resolvable:$true] %s26
      %32 = dma.hbm_to_vmem [thread:$0]  %s3, 4096, %s27, [#allocation3], 128, 128, 8
    $region17: #{tpu_custom_call.1} parent=1 // pred_fallthru
      _
    // Predicated region
    $region18: #{tpu_custom_call.1} parent=1 // pred_check
      _
    $region19: #{tpu_custom_call.1} parent=1 // pred_check_branch
      %34 = sbr.rel (0) target = $region21
    $region20: #{tpu_custom_call.1} parent=1 // pred_region
      _
    $region21: #{tpu_custom_call.1} parent=1 // pred_fallthru
      _
    // Predicated region
    $region22: #{tpu_custom_call.1} parent=1 // pred_check
      _
    $region23: #{tpu_custom_call.1} parent=1 // pred_check_branch
      %36 = sbr.rel (0) target = $region25
    $region24: #{tpu_custom_call.1} parent=1 // pred_region
      _
    $region25: #{tpu_custom_call.1} parent=1 // pred_fallthru
      _
    // Predicated region
    $region26: #{tpu_custom_call.1} parent=1 // pred_check
      _
    $region27: #{tpu_custom_call.1} parent=1 // pred_check_branch
      %38 = sbr.rel (0) target = $region29
    $region28: #{tpu_custom_call.1} parent=1 // pred_region
      _
    $region29: #{tpu_custom_call.1} parent=1 // pred_fallthru
      _
    // Predicated region
    $region30: #{tpu_custom_call.1} parent=1 // pred_check
      _
    $region31: #{tpu_custom_call.1} parent=1 // pred_check_branch
      %40 = sbr.rel (0) target = $region33
    $region32: #{tpu_custom_call.1} parent=1 // pred_region
      _
    $region33: #{tpu_custom_call.1} parent=1 // pred_fallthru
      _
    // Predicated region
    $region34: #{tpu_custom_call.1} parent=1 // pred_check
      _
    $region35: #{tpu_custom_call.1} parent=1 // pred_check_branch
      %42 = sbr.rel (0) target = $region37
    $region36: #{tpu_custom_call.1} parent=1 // pred_region
      _
    $region37: #{tpu_custom_call.1} parent=1 // pred_fallthru
      _
    // Predicated region
    $region38: #{tpu_custom_call.1} parent=1 // pred_check
      _
    $region39: #{tpu_custom_call.1} parent=1 // pred_check_branch
      %44 = sbr.rel (0) target = $region41
    $region40: #{tpu_custom_call.1} parent=1 // pred_region
      %45 = dma.done [#allocation3], 4096
    $region41: #{tpu_custom_call.1} parent=1 // pred_fallthru
      _
    %v46 = vld [vmem:[%s0] sm:$0xff]
    %v47 = vld [vmem:[%s1] sm:$0xff]
    %v48 = vld [vmem:[%s2] sm:$0x3]
    %v50 = vlaneseq
    %v51 = vshrl.u32 %v50, 7
    %v52 = vsub.s32 0, %v51
    %v53 = vrot.slane %v48, %v52
    %v54 = vlaneseq
    %v55 = vshrl.u32 %v54, 7
    %v56 = vsub.s32 1, %v55
    %v57 = vrot.slane %v48, %v56
    %v61 = vcombine.high %v47, %v47
    %vm62 = vcmask 31744
    %v64 = vsel %vm62, %v46, 0
    %vm66 = vcmask 1043456
    %v67 = vsel %vm66, %v47, 0
    %v69 = vsel %vm66, %v61, 0
    %71 = vmatprep.subr.mxu0 %v69
    %72 = vmatpush1.msra.mxu0 %v67
    %73 = vmatprep.subr.mxu0 0.0
    %74 = vmatpush1.msra.mxu0 0.0
    %75 = vmatprep.subr.mxu0 0.0
    %76 = vmatpush1.msra.mxu0 0.0
    %77 = vmatprep.subr.mxu0 0.0
    %78 = vmatpush1.msra.mxu0 0.0
    %79 = vmatprep.subr.mxu0 0.0
    %80 = vmatpush1.msra.mxu0 0.0
    %81 = vmatprep.subr.mxu0 0.0
    %82 = vmatpush1.msra.mxu0 0.0
    %83 = vmatprep.subr.mxu0 0.0
    %84 = vmatpush1.msra.mxu0 0.0
    %85 = vmatprep.subr.mxu0 0.0
    %86 = vmatpush1.msra.mxu0 0.0
    %87 = vmatprep.subr.mxu0 0.0
    %88 = vmatpush1.msra.mxu0 0.0
    %89 = vmatprep.subr.mxu0 0.0
    %90 = vmatpush1.msra.mxu0 0.0
    %91 = vmatprep.subr.mxu0 0.0
    %92 = vmatpush1.msra.mxu0 0.0
    %93 = vmatprep.subr.mxu0 0.0
    %94 = vmatpush1.msra.mxu0 0.0
    %95 = vmatprep.subr.mxu0 0.0
    %96 = vmatpush1.msra.mxu0 0.0
    %97 = vmatprep.subr.mxu0 0.0
    %98 = vmatpush1.msra.mxu0 0.0
    %99 = vmatprep.subr.mxu0 0.0
    %100 = vmatpush1.msra.mxu0 0.0
    %101 = vmatprep.subr.mxu0 0.0
    %102 = vmatpush1.msra.mxu0 0.0
    %103 = vmatprep.subr.mxu0 0.0
    %104 = vmatpush1.msra.mxu0 0.0
    %105 = vmatprep.subr.mxu0 0.0
    %106 = vmatpush1.msra.mxu0 0.0
    %107 = vmatprep.subr.mxu0 0.0
    %108 = vmatpush1.msra.mxu0 0.0
    %109 = vmatprep.subr.mxu0 0.0
    %110 = vmatpush1.msra.mxu0 0.0
    %111 = vmatprep.subr.mxu0 0.0
    %112 = vmatpush1.msra.mxu0 0.0
    %113 = vmatprep.subr.mxu0 0.0
    %114 = vmatpush1.msra.mxu0 0.0
    %115 = vmatprep.subr.mxu0 0.0
    %116 = vmatpush1.msra.mxu0 0.0
    %117 = vmatprep.subr.mxu0 0.0
    %118 = vmatpush1.msra.mxu0 0.0
    %119 = vmatprep.subr.mxu0 0.0
    %120 = vmatpush1.msra.mxu0 0.0
    %121 = vmatprep.subr.mxu0 0.0
    %122 = vmatpush1.msra.mxu0 0.0
    %123 = vmatprep.subr.mxu0 0.0
    %124 = vmatpush1.msra.mxu0 0.0
    %125 = vmatprep.subr.mxu0 0.0
    %126 = vmatpush1.msra.mxu0 0.0
    %127 = vmatprep.subr.mxu0 0.0
    %128 = vmatpush1.msra.mxu0 0.0
    %129 = vmatprep.subr.mxu0 0.0
    %130 = vmatpush1.msra.mxu0 0.0
    %131 = vmatprep.subr.mxu0 0.0
    %132 = vmatpush1.msra.mxu0 0.0
    %133 = vmatprep.subr.mxu0 0.0
    %134 = vmatpush1.msra.mxu0 0.0
    %135 = vmatprep.mubr.f32.mxu0 0.0
    %136 = vmatmul.mubr.f32.gmra.mrb[0].mxu0 %v64
    %v137 = vpop.f32.mrb[0].mxu0
    %v138 = vadd.f32 %v53, %v137
    %v139 = vpop.f32.mrb[0].mxu0
    %v140 = vadd.f32 %v57, %v139
    %141 = vdwg.mxu0
    %v142 = vmax.f32 %v138, 0.0
    %v143 = vmax.f32 %v140, 0.0
    %v144 = vld [vmem:[#allocation2] sm:$0xff]
    %v145 = vld [vmem:[#allocation2 + $0x8] sm:$0xff]
    %v146 = vld [vmem:[#allocation2 + $0x10] sm:$0xff]
    %v147 = vld [vmem:[#allocation2 + $0x18] sm:$0xff]
    %v148 = vld [vmem:[#allocation2 + $0x20] sm:$0xff]
    %v149 = vld [vmem:[#allocation2 + $0x28] sm:$0xff]
    %v150 = vld [vmem:[#allocation2 + $0x30] sm:$0xff]
    %v151 = vld [vmem:[#allocation2 + $0x38] sm:$0xff]
    %v152 = vld [vmem:[#allocation2 + $0x40] sm:$0xff]
    %v153 = vld [vmem:[#allocation2 + $0x48] sm:$0xff]
    %v154 = vld [vmem:[#allocation2 + $0x50] sm:$0xff]
    %v155 = vld [vmem:[#allocation2 + $0x58] sm:$0xff]
    %v156 = vld [vmem:[#allocation2 + $0x60] sm:$0xff]
    %v157 = vld [vmem:[#allocation2 + $0x68] sm:$0xff]
    %v158 = vld [vmem:[#allocation2 + $0x70] sm:$0xff]
    %v159 = vld [vmem:[#allocation2 + $0x78] sm:$0xff]
    %v160 = vld [vmem:[#allocation2 + $0x80] sm:$0xff]
    %v161 = vld [vmem:[#allocation2 + $0x88] sm:$0xff]
    %v162 = vld [vmem:[#allocation2 + $0x90] sm:$0xff]
    %v163 = vld [vmem:[#allocation2 + $0x98] sm:$0xff]
    %v164 = vld [vmem:[#allocation2 + $0xa0] sm:$0xff]
    %v165 = vld [vmem:[#allocation2 + $0xa8] sm:$0xff]
    %v166 = vld [vmem:[#allocation2 + $0xb0] sm:$0xff]
    %v167 = vld [vmem:[#allocation2 + $0xb8] sm:$0xff]
    %v168 = vld [vmem:[#allocation2 + $0xc0] sm:$0xff]
    %v169 = vld [vmem:[#allocation2 + $0xc8] sm:$0xff]
    %v170 = vld [vmem:[#allocation2 + $0xd0] sm:$0xff]
    %v171 = vld [vmem:[#allocation2 + $0xd8] sm:$0xff]
    %v172 = vld [vmem:[#allocation2 + $0xe0] sm:$0xff]
    %v173 = vld [vmem:[#allocation2 + $0xe8] sm:$0xff]
    %v174 = vld [vmem:[#allocation2 + $0xf0] sm:$0xff]
    %v175 = vld [vmem:[#allocation2 + $0xf8] sm:$0xff]
    %v176 = vld [vmem:[%s4] sm:$0x1]
    %v178 = vlaneseq
    %v179 = vshrl.u32 %v178, 7
    %v180 = vsub.s32 0, %v179
    %v181 = vrot.slane %v176, %v180
    %183 = vmatprep.subr.mxu0 0.0
    %184 = vmatpush1.msra.mxu0 %v144
    %185 = vmatprep.subr.mxu0 0.0
    %186 = vmatpush1.msra.mxu0 %v145
    %187 = vmatprep.subr.mxu0 0.0
    %188 = vmatpush1.msra.mxu0 %v146
    %189 = vmatprep.subr.mxu0 0.0
    %190 = vmatpush1.msra.mxu0 %v147
    %191 = vmatprep.subr.mxu0 0.0
    %192 = vmatpush1.msra.mxu0 %v148
    %193 = vmatprep.subr.mxu0 0.0
    %194 = vmatpush1.msra.mxu0 %v149
    %195 = vmatprep.subr.mxu0 0.0
    %196 = vmatpush1.msra.mxu0 %v150
    %197 = vmatprep.subr.mxu0 0.0
    %198 = vmatpush1.msra.mxu0 %v151
    %199 = vmatprep.subr.mxu0 0.0
    %200 = vmatpush1.msra.mxu0 %v152
    %201 = vmatprep.subr.mxu0 0.0
    %202 = vmatpush1.msra.mxu0 %v153
    %203 = vmatprep.subr.mxu0 0.0
    %204 = vmatpush1.msra.mxu0 %v154
    %205 = vmatprep.subr.mxu0 0.0
    %206 = vmatpush1.msra.mxu0 %v155
    %207 = vmatprep.subr.mxu0 0.0
    %208 = vmatpush1.msra.mxu0 %v156
    %209 = vmatprep.subr.mxu0 0.0
    %210 = vmatpush1.msra.mxu0 %v157
    %211 = vmatprep.subr.mxu0 0.0
    %212 = vmatpush1.msra.mxu0 %v158
    %213 = vmatprep.subr.mxu0 0.0
    %214 = vmatpush1.msra.mxu0 %v159
    %215 = vmatprep.subr.mxu0 0.0
    %216 = vmatpush1.msra.mxu0 %v160
    %217 = vmatprep.subr.mxu0 0.0
    %218 = vmatpush1.msra.mxu0 %v161
    %219 = vmatprep.subr.mxu0 0.0
    %220 = vmatpush1.msra.mxu0 %v162
    %221 = vmatprep.subr.mxu0 0.0
    %222 = vmatpush1.msra.mxu0 %v163
    %223 = vmatprep.subr.mxu0 0.0
    %224 = vmatpush1.msra.mxu0 %v164
    %225 = vmatprep.subr.mxu0 0.0
    %226 = vmatpush1.msra.mxu0 %v165
    %227 = vmatprep.subr.mxu0 0.0
    %228 = vmatpush1.msra.mxu0 %v166
    %229 = vmatprep.subr.mxu0 0.0
    %230 = vmatpush1.msra.mxu0 %v167
    %231 = vmatprep.subr.mxu0 0.0
    %232 = vmatpush1.msra.mxu0 %v168
    %233 = vmatprep.subr.mxu0 0.0
    %234 = vmatpush1.msra.mxu0 %v169
    %235 = vmatprep.subr.mxu0 0.0
    %236 = vmatpush1.msra.mxu0 %v170
    %237 = vmatprep.subr.mxu0 0.0
    %238 = vmatpush1.msra.mxu0 %v171
    %239 = vmatprep.subr.mxu0 0.0
    %240 = vmatpush1.msra.mxu0 %v172
    %241 = vmatprep.subr.mxu0 0.0
    %242 = vmatpush1.msra.mxu0 %v173
    %243 = vmatprep.subr.mxu0 0.0
    %244 = vmatpush1.msra.mxu0 %v174
    %245 = vmatprep.subr.mxu0 0.0
    %246 = vmatpush1.msra.mxu0 %v175
    %247 = vmatprep.mubr.f32.mxu0 %v143
    %248 = vmatmul.mubr.f32.gmra.mrb[0].mxu0 %v142
    %v249 = vpop.f32.mrb[0].mxu0
    %v250 = vadd.f32 %v181, %v249
    %v251 = vpop.f32.mrb[0].mxu0
    %252 = vdwg.mxu0
    %v253 = vmax.f32 %v250, 0.0
    %v254 = vld [vmem:[%s5] sm:$0xff]
    %v255 = vld [vmem:[%s5 + $0x8] sm:$0xff]
    %v256 = vld [vmem:[%s5 + $0x10] sm:$0xff]
    %v257 = vld [vmem:[%s5 + $0x18] sm:$0xff]
    %v258 = vld [vmem:[%s5 + $0x20] sm:$0xff]
    %v259 = vld [vmem:[%s5 + $0x28] sm:$0xff]
    %v260 = vld [vmem:[%s5 + $0x30] sm:$0xff]
    %v261 = vld [vmem:[%s5 + $0x38] sm:$0xff]
    %v262 = vld [vmem:[%s5 + $0x40] sm:$0xff]
    %v263 = vld [vmem:[%s5 + $0x48] sm:$0xff]
    %v264 = vld [vmem:[%s5 + $0x50] sm:$0xff]
    %v265 = vld [vmem:[%s5 + $0x58] sm:$0xff]
    %v266 = vld [vmem:[%s5 + $0x60] sm:$0xff]
    %v267 = vld [vmem:[%s5 + $0x68] sm:$0xff]
    %v268 = vld [vmem:[%s5 + $0x70] sm:$0xff]
    %v269 = vld [vmem:[%s5 + $0x78] sm:$0xff]
    %v270 = vld [vmem:[%s6] sm:$0x1]
    %v272 = vlaneseq
    %v273 = vshrl.u32 %v272, 7
    %v274 = vsub.s32 0, %v273
    %v275 = vrot.slane %v270, %v274
    %277 = vmatprep.subr.mxu0 0.0
    %278 = vmatpush1.msra.mxu0 %v254
    %279 = vmatprep.subr.mxu0 0.0
    %280 = vmatpush1.msra.mxu0 %v255
    %281 = vmatprep.subr.mxu0 0.0
    %282 = vmatpush1.msra.mxu0 %v256
    %283 = vmatprep.subr.mxu0 0.0
    %284 = vmatpush1.msra.mxu0 %v257
    %285 = vmatprep.subr.mxu0 0.0
    %286 = vmatpush1.msra.mxu0 %v258
    %287 = vmatprep.subr.mxu0 0.0
    %288 = vmatpush1.msra.mxu0 %v259
    %289 = vmatprep.subr.mxu0 0.0
    %290 = vmatpush1.msra.mxu0 %v260
    %291 = vmatprep.subr.mxu0 0.0
    %292 = vmatpush1.msra.mxu0 %v261
    %293 = vmatprep.subr.mxu0 0.0
    %294 = vmatpush1.msra.mxu0 %v262
    %295 = vmatprep.subr.mxu0 0.0
    %296 = vmatpush1.msra.mxu0 %v263
    %297 = vmatprep.subr.mxu0 0.0
    %298 = vmatpush1.msra.mxu0 %v264
    %299 = vmatprep.subr.mxu0 0.0
    %300 = vmatpush1.msra.mxu0 %v265
    %301 = vmatprep.subr.mxu0 0.0
    %302 = vmatpush1.msra.mxu0 %v266
    %303 = vmatprep.subr.mxu0 0.0
    %304 = vmatpush1.msra.mxu0 %v267
    %305 = vmatprep.subr.mxu0 0.0
    %306 = vmatpush1.msra.mxu0 %v268
    %307 = vmatprep.subr.mxu0 0.0
    %308 = vmatpush1.msra.mxu0 %v269
    %309 = vmatprep.subr.mxu0 0.0
    %310 = vmatpush1.msra.mxu0 0.0
    %311 = vmatprep.subr.mxu0 0.0
    %312 = vmatpush1.msra.mxu0 0.0
    %313 = vmatprep.subr.mxu0 0.0
    %314 = vmatpush1.msra.mxu0 0.0
    %315 = vmatprep.subr.mxu0 0.0
    %316 = vmatpush1.msra.mxu0 0.0
    %317 = vmatprep.subr.mxu0 0.0
    %318 = vmatpush1.msra.mxu0 0.0
    %319 = vmatprep.subr.mxu0 0.0
    %320 = vmatpush1.msra.mxu0 0.0
    %321 = vmatprep.subr.mxu0 0.0
    %322 = vmatpush1.msra.mxu0 0.0
    %323 = vmatprep.subr.mxu0 0.0
    %324 = vmatpush1.msra.mxu0 0.0
    %325 = vmatprep.subr.mxu0 0.0
    %326 = vmatpush1.msra.mxu0 0.0
    %327 = vmatprep.subr.mxu0 0.0
    %328 = vmatpush1.msra.mxu0 0.0
    %329 = vmatprep.subr.mxu0 0.0
    %330 = vmatpush1.msra.mxu0 0.0
    %331 = vmatprep.subr.mxu0 0.0
    %332 = vmatpush1.msra.mxu0 0.0
    %333 = vmatprep.subr.mxu0 0.0
    %334 = vmatpush1.msra.mxu0 0.0
    %335 = vmatprep.subr.mxu0 0.0
    %336 = vmatpush1.msra.mxu0 0.0
    %337 = vmatprep.subr.mxu0 0.0
    %338 = vmatpush1.msra.mxu0 0.0
    %339 = vmatprep.subr.mxu0 0.0
    %340 = vmatpush1.msra.mxu0 0.0
    %341 = vmatprep.mubr.f32.mxu0 0.0
    %342 = vmatmul.mubr.f32.gmra.mrb[0].mxu0 %v253
    %v343 = vpop.f32.mrb[0].mxu0
    %v344 = vadd.f32 %v275, %v343
    %v345 = vpop.f32.mrb[0].mxu0
    %346 = vdwg.mxu0
    %v347 = vmax.f32 %v344, 0.0
    %v348 = vld [vmem:[%s7] sm:$0xff]
    %v349 = vld [vmem:[%s7 + $0x8] sm:$0xff]
    %v350 = vld [vmem:[%s7 + $0x10] sm:$0xff]
    %v351 = vld [vmem:[%s7 + $0x18] sm:$0xff]
    %v352 = vld [vmem:[%s7 + $0x20] sm:$0xff]
    %v353 = vld [vmem:[%s7 + $0x28] sm:$0xff]
    %v354 = vld [vmem:[%s7 + $0x30] sm:$0xff]
    %v355 = vld [vmem:[%s7 + $0x38] sm:$0xff]
    %v356 = vld [vmem:[%s7 + $0x40] sm:$0xff]
    %v357 = vld [vmem:[%s7 + $0x48] sm:$0xff]
    %v358 = vld [vmem:[%s7 + $0x50] sm:$0xff]
    %v359 = vld [vmem:[%s7 + $0x58] sm:$0xff]
    %v360 = vld [vmem:[%s7 + $0x60] sm:$0xff]
    %v361 = vld [vmem:[%s7 + $0x68] sm:$0xff]
    %v362 = vld [vmem:[%s7 + $0x70] sm:$0xff]
    %v363 = vld [vmem:[%s7 + $0x78] sm:$0xff]
    %v364 = vld [vmem:[%s8] sm:$0x1]
    %v366 = vlaneseq
    %v367 = vshrl.u32 %v366, 7
    %v368 = vsub.s32 0, %v367
    %v369 = vrot.slane %v364, %v368
    %371 = vmatprep.subr.mxu0 0.0
    %372 = vmatpush1.msra.mxu0 %v348
    %373 = vmatprep.subr.mxu0 0.0
    %374 = vmatpush1.msra.mxu0 %v349
    %375 = vmatprep.subr.mxu0 0.0
    %376 = vmatpush1.msra.mxu0 %v350
    %377 = vmatprep.subr.mxu0 0.0
    %378 = vmatpush1.msra.mxu0 %v351
    %379 = vmatprep.subr.mxu0 0.0
    %380 = vmatpush1.msra.mxu0 %v352
    %381 = vmatprep.subr.mxu0 0.0
    %382 = vmatpush1.msra.mxu0 %v353
    %383 = vmatprep.subr.mxu0 0.0
    %384 = vmatpush1.msra.mxu0 %v354
    %385 = vmatprep.subr.mxu0 0.0
    %386 = vmatpush1.msra.mxu0 %v355
    %387 = vmatprep.subr.mxu0 0.0
    %388 = vmatpush1.msra.mxu0 %v356
    %389 = vmatprep.subr.mxu0 0.0
    %390 = vmatpush1.msra.mxu0 %v357
    %391 = vmatprep.subr.mxu0 0.0
    %392 = vmatpush1.msra.mxu0 %v358
    %393 = vmatprep.subr.mxu0 0.0
    %394 = vmatpush1.msra.mxu0 %v359
    %395 = vmatprep.subr.mxu0 0.0
    %396 = vmatpush1.msra.mxu0 %v360
    %397 = vmatprep.subr.mxu0 0.0
    %398 = vmatpush1.msra.mxu0 %v361
    %399 = vmatprep.subr.mxu0 0.0
    %400 = vmatpush1.msra.mxu0 %v362
    %401 = vmatprep.subr.mxu0 0.0
    %402 = vmatpush1.msra.mxu0 %v363
    %403 = vmatprep.subr.mxu0 0.0
    %404 = vmatpush1.msra.mxu0 0.0
    %405 = vmatprep.subr.mxu0 0.0
    %406 = vmatpush1.msra.mxu0 0.0
    %407 = vmatprep.subr.mxu0 0.0
    %408 = vmatpush1.msra.mxu0 0.0
    %409 = vmatprep.subr.mxu0 0.0
    %410 = vmatpush1.msra.mxu0 0.0
    %411 = vmatprep.subr.mxu0 0.0
    %412 = vmatpush1.msra.mxu0 0.0
    %413 = vmatprep.subr.mxu0 0.0
    %414 = vmatpush1.msra.mxu0 0.0
    %415 = vmatprep.subr.mxu0 0.0
    %416 = vmatpush1.msra.mxu0 0.0
    %417 = vmatprep.subr.mxu0 0.0
    %418 = vmatpush1.msra.mxu0 0.0
    %419 = vmatprep.subr.mxu0 0.0
    %420 = vmatpush1.msra.mxu0 0.0
    %421 = vmatprep.subr.mxu0 0.0
    %422 = vmatpush1.msra.mxu0 0.0
    %423 = vmatprep.subr.mxu0 0.0
    %424 = vmatpush1.msra.mxu0 0.0
    %425 = vmatprep.subr.mxu0 0.0
    %426 = vmatpush1.msra.mxu0 0.0
    %427 = vmatprep.subr.mxu0 0.0
    %428 = vmatpush1.msra.mxu0 0.0
    %429 = vmatprep.subr.mxu0 0.0
    %430 = vmatpush1.msra.mxu0 0.0
    %431 = vmatprep.subr.mxu0 0.0
    %432 = vmatpush1.msra.mxu0 0.0
    %433 = vmatprep.subr.mxu0 0.0
    %434 = vmatpush1.msra.mxu0 0.0
    %435 = vmatprep.mubr.f32.mxu0 0.0
    %436 = vmatmul.mubr.f32.gmra.mrb[0].mxu0 %v347
    %v437 = vpop.f32.mrb[0].mxu0
    %v438 = vadd.f32 %v369, %v437
    %v439 = vpop.f32.mrb[0].mxu0
    %440 = vdwg.mxu0
    %v441 = vtanh.pop %v438
    %v442 = vmul.f32 %v441, 2.0
    %vm443 = vcmask 15360
    %444 = vst.msk [vmem:[%s9] sm:$0xff] %vm443, %v442
    // Predicated region
    $region42: #{tpu_custom_call.1} parent=1 // pred_check
      _
    $region43: #{tpu_custom_call.1} parent=1 // pred_check_branch
      %446 = sbr.rel (0) target = $region45
    $region44: #{tpu_custom_call.1} parent=1 // pred_region
      _
    $region45: #{tpu_custom_call.1} parent=1 // pred_fallthru
      _
    // Predicated region
    $region46: #{tpu_custom_call.1} parent=1 // pred_check
      _
    $region47: #{tpu_custom_call.1} parent=1 // pred_check_branch
      %448 = sbr.rel (0) target = $region49
    $region48: #{tpu_custom_call.1} parent=1 // pred_region
      _
    $region49: #{tpu_custom_call.1} parent=1 // pred_fallthru
      _
    %449 = vsyncpa [#allocation3], 1

</llo_original>
